<compile_context>
chip_gen: v7x
topology: tpu7x:2x2x1
jax: 0.10.0
libtpu: 0.0.40
codegen_flags: <defaults>
</compile_context>

<pallas_src>
import math
import functools

import jax
import jax.numpy as jnp
from jax import lax
from jax.experimental import pallas as pl
from jax.experimental.pallas import tpu as pltpu

IGNORE = -100000.0  # matches the PyTorch `IGNORE` buffer (masked_fill value)


# ---------------------------------------------------------------------------
# helpers
# ---------------------------------------------------------------------------
def _round_up(x, m):
    return ((x + m - 1) // m) * m


def _pick_tile(dim, target, quantum):
    """Largest multiple of `quantum` dividing `dim` that is <= target.
    Falls back to the full dim (always a legal Mosaic block)."""
    if dim <= target:
        return dim
    t = (target // quantum) * quantum
    while t >= quantum:
        if dim % t == 0:
            return t
        t -= quantum
    return dim


def _vmem_capacity_bytes():
    try:
        info = pltpu.get_tpu_info()
        for attr in ("vmem_capacity_bytes", "vmem_bytes", "vmem_size_bytes"):
            v = getattr(info, attr, None)
            if v:
                return int(v)
    except Exception:
        pass
    return 64 * 1024 * 1024  # conservative default (v7x-class)


def _generation_tuning():
    vmem = _vmem_capacity_bytes()
    if vmem <= 64 * 1024 * 1024:     # v7x-class (64 MiB physical VMEM)
        return dict(q_target=256, vmem_limit=48 * 1024 * 1024)
    # v5e / v6e (128 MiB VMEM): bigger tiles amortize per-grid-step overhead
    return dict(q_target=512, vmem_limit=100 * 1024 * 1024)


# ---------------------------------------------------------------------------
# generic tiled matmul + bias kernel (used for QKV and output projections)
# ---------------------------------------------------------------------------
def _matmul_bias_kernel(x_ref, w_ref, b_ref, o_ref, acc_ref):
    @pl.when(pl.program_id(2) == 0)
    def _():
        acc_ref[...] = jnp.zeros_like(acc_ref)

    acc_ref[...] += jnp.dot(x_ref[...], w_ref[...],
                            preferred_element_type=jnp.float32)

    @pl.when(pl.program_id(2) == pl.num_programs(2) - 1)
    def _():
        o_ref[...] = (acc_ref[...] + b_ref[...]).astype(o_ref.dtype)


def _matmul_bias(x, w, b, *, out_dtype, vmem_limit):
    M, K = x.shape
    K2, N = w.shape
    assert K == K2 and b.shape == (1, N)
    tm = _pick_tile(M, 256, 8)
    tn = _pick_tile(N, 512, 128)
    tk = _pick_tile(K, 512, 128)
    grid = (M // tm, N // tn, K // tk)
    return pl.pallas_call(
        _matmul_bias_kernel,
        out_shape=jax.ShapeDtypeStruct((M, N), out_dtype),
        grid_spec=pltpu.PrefetchScalarGridSpec(
            num_scalar_prefetch=0,
            grid=grid,
            in_specs=[pl.BlockSpec((tm, tk), lambda i, j, kk: (i, kk)),
                      pl.BlockSpec((tk, tn), lambda i, j, kk: (kk, j)),
                      pl.BlockSpec((1, tn), lambda i, j, kk: (0, j))],
            out_specs=pl.BlockSpec((tm, tn), lambda i, j, kk: (i, j)),
            scratch_shapes=[pltpu.VMEM((tm, tn), jnp.float32)]),
        compiler_params=pltpu.CompilerParams(
            dimension_semantics=("parallel", "parallel", "arbitrary"),
            vmem_limit_bytes=vmem_limit),
    )(x, w, b)


# ---------------------------------------------------------------------------
# flash-style causal attention kernel
# ---------------------------------------------------------------------------
def _flash_attn_kernel(q_ref, k_ref, v_ref, o_ref, m_sc, l_sc, acc_sc,
                       *, q_block, kv_block, compute_dtype):
    qi = pl.program_id(2)
    kv = pl.program_id(3)
    n_kv = pl.num_programs(3)

    @pl.when(kv == 0)
    def _():
        m_sc[...] = jnp.full_like(m_sc, -jnp.inf)
        l_sc[...] = jnp.zeros_like(l_sc)
        acc_sc[...] = jnp.zeros_like(acc_sc)

    # Causal tile skip: a KV tile entirely in the future contributes exactly 0
    # to the reference softmax (exp(IGNORE - m) underflows to 0 in f32), so we
    # skip its MXU/EUP work.  kv_block == q_block (wrapper-enforced) -> kv <= qi.
    @pl.when(kv <= qi)
    def _():
        q = q_ref[...].astype(compute_dtype)     # (tq,  Dh); 1/sqrt(Dh) pre-folded
        k = k_ref[...].astype(compute_dtype)     # (tkv, Dh)
        v = v_ref[...].astype(compute_dtype)     # (tkv, Dh)

        # scores: contract d_head directly (no explicit k transpose)
        s = lax.dot_general(q, k, (((1,), (1,)), ((), ())),
                            preferred_element_type=jnp.float32)   # (tq, tkv)

        # causal mask -- masked_fill(IGNORE) semantics of the PyTorch module
        row = qi * q_block + lax.broadcasted_iota(jnp.int32, s.shape, 0)
        col = kv * kv_block + lax.broadcasted_iota(jnp.int32, s.shape, 1)
        s = jnp.where(col > row, IGNORE, s)

        # online softmax update
        m_prev = m_sc[...]
        m_new = jnp.maximum(m_prev, jnp.max(s, axis=-1, keepdims=True))
        alpha = jnp.exp(m_prev - m_new)
        p = jnp.exp(s - m_new)
        l_sc[...] = alpha * l_sc[...] + jnp.sum(p, axis=-1, keepdims=True)
        acc_sc[...] = alpha * acc_sc[...] + jnp.dot(
            p.astype(compute_dtype), v, preferred_element_type=jnp.float32)
        m_sc[...] = m_new

    @pl.when(kv == n_kv - 1)
    def _():
        if jnp.dtype(compute_dtype) == jnp.dtype(jnp.float32):
            out = acc_sc[...] / l_sc[...]          # exact (strict-parity path)
        else:
            out = acc_sc[...] * pl.reciprocal(l_sc[...], approx=True)  # EUP vrcp
        o_ref[...] = out.astype(o_ref.dtype)


def _flash_attention(q, k, v, *, q_block, kv_block, compute_dtype, vmem_limit):
    B, H, Sp, Dh = q.shape
    assert q_block == kv_block and Sp % q_block == 0
    n_q = Sp // q_block
    n_kv = Sp // kv_block

    kernel = functools.partial(_flash_attn_kernel, q_block=q_block,
                               kv_block=kv_block, compute_dtype=compute_dtype)

    q_spec = pl.BlockSpec((None, None, q_block, Dh),
                          lambda b, h, qi, kv: (b, h, qi, 0))
    # Clamp the kv block index at the causal frontier: once kv > qi the index
    # stops changing, so Pallas does not re-DMA those (unused) future tiles.
    kv_spec = pl.BlockSpec((None, None, kv_block, Dh),
                           lambda b, h, qi, kv: (b, h, jnp.minimum(kv, qi), 0))

    return pl.pallas_call(
        kernel,
        out_shape=jax.ShapeDtypeStruct((B, H, Sp, Dh), compute_dtype),
        grid_spec=pltpu.PrefetchScalarGridSpec(
            num_scalar_prefetch=0,
            grid=(B, H, n_q, n_kv),
            in_specs=[q_spec, kv_spec, kv_spec],
            out_specs=pl.BlockSpec((None, None, q_block, Dh),
                                   lambda b, h, qi, kv: (b, h, qi, 0)),
            scratch_shapes=[pltpu.VMEM((q_block, 1), jnp.float32),    # running max
                            pltpu.VMEM((q_block, 1), jnp.float32),    # running sum
                            pltpu.VMEM((q_block, Dh), jnp.float32)],  # accumulator
        ),
        compiler_params=pltpu.CompilerParams(
            dimension_semantics=("parallel", "parallel", "parallel", "arbitrary"),
            vmem_limit_bytes=vmem_limit),
    )(q, k, v)


# ---------------------------------------------------------------------------
# parameter fusion (one-time, hoistable) + forward wrapper
# ---------------------------------------------------------------------------
def fuse_attention_params(W_Q, W_K, W_V, W_O, b_Q, b_K, b_V, b_O,
                          *, compute_dtype=jnp.bfloat16):
    """One-time parameter preparation -- hoist/cache this, weights are static.

    Zero-pads d_model to a multiple of 128 (exact), fuses heads into wide
    matrices, folds 1/sqrt(d_head) into W_Q / b_Q, pre-casts fused weights to
    `compute_dtype` (bf16 halves their DMA + VMEM footprint)."""
    H, D, Dh = W_Q.shape
    Dp = _round_up(D, 128)
    HD = H * Dh
    scale = 1.0 / math.sqrt(Dh)

    def pad_rows(w):  # (H, D, Dh) -> (H, Dp, Dh)
        return jnp.pad(w, ((0, 0), (0, Dp - D), (0, 0))) if Dp != D else w

    wq = jnp.transpose(pad_rows(W_Q) * scale, (1, 0, 2)).reshape(Dp, HD)
    wk = jnp.transpose(pad_rows(W_K), (1, 0, 2)).reshape(Dp, HD)
    wv = jnp.transpose(pad_rows(W_V), (1, 0, 2)).reshape(Dp, HD)
    w_qkv = jnp.concatenate([wq, wk, wv], axis=1).astype(compute_dtype)  # (Dp, 3HD)
    b_qkv = jnp.concatenate([(b_Q * scale).reshape(-1), b_K.reshape(-1),
                             b_V.reshape(-1)]).reshape(1, 3 * HD).astype(jnp.float32)

    wo = W_O.reshape(HD, D)
    if Dp != D:
        wo = jnp.pad(wo, ((0, 0), (0, Dp - D)))
        bo = jnp.pad(b_O, (0, Dp - D))
    else:
        bo = b_O
    w_o = wo.astype(compute_dtype)                 # (HD, Dp)
    b_o = bo.reshape(1, Dp).astype(jnp.float32)

    return dict(w_qkv=w_qkv, b_qkv=b_qkv, w_o=w_o, b_o=b_o,
                n_heads=H, d_head=Dh, d_model=D, d_model_padded=Dp,
                compute_dtype=compute_dtype)


def self_attention_fused(resid_pre, params):
    B, S, D = resid_pre.shape
    H, Dh = params["n_heads"], params["d_head"]
    Dp = params["d_model_padded"]
    HD = H * Dh
    cdt = params["compute_dtype"]
    assert D == params["d_model"]

    tune = _generation_tuning()
    q_block = min(tune["q_target"], _round_up(S, 8))
    kv_block = q_block                 # same tiling on both axes (causal skip)
    Sp = _round_up(S, q_block)         # pad S (no collapse to one giant tile)
    vmem_limit = tune["vmem_limit"]

    x = resid_pre
    if Sp != S or Dp != D:
        # Zero padding is exact: padded d_model columns contribute 0 to the
        # matmuls; padded key rows are killed by the causal mask; padded query
        # rows are sliced off below.
        x = jnp.pad(x, ((0, 0), (0, Sp - S), (0, Dp - D)))
    x2 = x.reshape(B * Sp, Dp).astype(cdt)

    # 1) fused Q/K/V projection -- computed once (not once per query tile)
    qkv = _matmul_bias(x2, params["w_qkv"], params["b_qkv"],
                       out_dtype=cdt, vmem_limit=vmem_limit)        # (B*Sp, 3*HD)
    qkv = qkv.reshape(B, Sp, 3, H, Dh).transpose(2, 0, 3, 1, 4)     # (3, B, H, Sp, Dh)
    q, k, v = qkv[0], qkv[1], qkv[2]

    # 2) flash attention: VMEM O(tq*Dh), KV-tile grid axis, causal tile skip
    z = _flash_attention(q, k, v, q_block=q_block, kv_block=kv_block,
                         compute_dtype=cdt, vmem_limit=vmem_limit)  # (B, H, Sp, Dh)

    # 3) fused output projection over all heads
    z2 = jnp.transpose(z, (0, 2, 1, 3)).reshape(B * Sp, HD)
    out = _matmul_bias(z2, params["w_o"], params["b_o"],
                       out_dtype=resid_pre.dtype, vmem_limit=vmem_limit)
    out = out.reshape(B, Sp, Dp)
    if Sp != S or Dp != D:
        out = out[:, :S, :D]
    return out


def self_attention(resid_pre, W_Q, W_K, W_V, W_O, b_Q, b_K, b_V, b_O,
                   *, compute_dtype=jnp.bfloat16):
    # Convenience entry point.  For repeated calls, hoist
    # fuse_attention_params(...) out of the loop (weights are static).
    params = fuse_attention_params(W_Q, W_K, W_V, W_O, b_Q, b_K, b_V, b_O,
                                   compute_dtype=compute_dtype)
    return self_attention_fused(resid_pre, params)


# ---------------------------------------------------------------------------
# pure-JAX reference (mirrors the PyTorch forward exactly)
# ---------------------------------------------------------------------------
def _reference(x, W_Q, W_K, W_V, W_O, b_Q, b_K, b_V, b_O):
    q = jnp.einsum('bpd,hdk->bphk', x, W_Q) + b_Q
    k = jnp.einsum('bpd,hdk->bphk', x, W_K) + b_K
    v = jnp.einsum('bpd,hdk->bphk', x, W_V) + b_V
    scores = jnp.einsum('bqhk,bKhk->bhqK', q, k) / math.sqrt(W_Q.shape[-1])
    S = x.shape[1]
    mask = jnp.triu(jnp.ones((S, S), dtype=bool), k=1)
    scores = jnp.where(mask, IGNORE, scores)
    pattern = jax.nn.softmax(scores, axis=-1)
    z = jnp.einsum('bhqK,bKhk->bqhk', pattern, v)
    return jnp.einsum('bqhk,hkd->bqd', z, W_O) + b_O


if __name__ == "__main__":
    # Config: n_heads=4, d_model=32, d_head=8, init_range=0.02; batch=2, seq=8.
    B, S, D, H, Dh = 2, 8, 32, 4, 8
    init_range = 0.02

    key = jax.random.PRNGKey(0)
    kx, kq, kk_, kv_, ko = jax.random.split(key, 5)

    x = jax.random.normal(kx, (B, S, D), dtype=jnp.float32)
    W_Q = init_range * jax.random.normal(kq, (H, D, Dh), dtype=jnp.float32)
    W_K = init_range * jax.random.normal(kk_, (H, D, Dh), dtype=jnp.float32)
    W_V = init_range * jax.random.normal(kv_, (H, D, Dh), dtype=jnp.float32)
    W_O = init_range * jax.random.normal(ko, (H, Dh, D), dtype=jnp.float32)
    b_Q = jnp.zeros((H, Dh), dtype=jnp.float32)
    b_K = jnp.zeros((H, Dh), dtype=jnp.float32)
    b_V = jnp.zeros((H, Dh), dtype=jnp.float32)
    b_O = jnp.zeros((D,), dtype=jnp.float32)

    ref = _reference(x, W_Q, W_K, W_V, W_O, b_Q, b_K, b_V, b_O)

    # f32-operand path (strict parity: exact softmax normalization).
    out_f32 = jax.block_until_ready(
        self_attention(x, W_Q, W_K, W_V, W_O, b_Q, b_K, b_V, b_O,
                       compute_dtype=jnp.float32))
    assert out_f32.shape == x.shape
    assert not bool(jnp.isnan(out_f32).any())
    assert jnp.allclose(out_f32, ref, atol=1e-3, rtol=1e-2), \
        float(jnp.max(jnp.abs(out_f32 - ref)))

    # Default bf16-operand path (f32 accumulation / softmax) -- recommended on
    # all generations (v5e/v6e/v7x MXUs are bf16-native).
    out_bf16 = jax.block_until_ready(
        self_attention(x, W_Q, W_K, W_V, W_O, b_Q, b_K, b_V, b_O))
    assert out_bf16.shape == x.shape
    assert not bool(jnp.isnan(out_bf16).any())
    assert jnp.allclose(out_bf16, ref, atol=1e-2, rtol=5e-2), \
        float(jnp.max(jnp.abs(out_bf16 - ref)))

    print("KERNEL_OK")
</pallas_src>

<mosaic_0001>
module attributes {stable_mosaic.version = 11 : i64} {
  func.func @_matmul_bias_kernel(%arg0: i32, %arg1: i32, %arg2: i32, %arg3: memref<16x128xf32, #tpu.memory_space<vmem>>, %arg4: memref<128x96xf32, #tpu.memory_space<vmem>>, %arg5: memref<1x96xf32, #tpu.memory_space<vmem>>, %arg6: memref<16x96xf32, #tpu.memory_space<vmem>>, %arg7: memref<16x96xf32, #tpu.memory_space<vmem>>) attributes {dimension_semantics = [#tpu.dimension_semantics<parallel>, #tpu.dimension_semantics<parallel>, #tpu.dimension_semantics<arbitrary>], iteration_bounds = array<i64: 1, 1, 1>, scalar_prefetch = 0 : i64, scratch_operands = 1 : i64, tpu.core_type = #tpu.core_type<tc>, window_params = [{transform_indices = @transform_0, window_bounds = array<i64: 16, 128>}, {transform_indices = @transform_1, window_bounds = array<i64: 128, 96>}, {transform_indices = @transform_2, window_bounds = array<i64: 1, 96>}, {transform_indices = @transform_3, window_bounds = array<i64: 16, 96>}]} {
    %c0_i32 = arith.constant 0 : i32
    %0 = arith.cmpi eq, %arg2, %c0_i32 : i32
    %1 = arith.extui %0 : i1 to i32
    %c0_i32_0 = arith.constant 0 : i32
    %2 = arith.cmpi ne, %1, %c0_i32_0 : i32
    scf.if %2 {
      %cst_10 = arith.constant 0.000000e+00 : f32
      %12 = vector.broadcast %cst_10 : f32 to vector<16x96xf32>
      %c0_11 = arith.constant 0 : index
      %c0_12 = arith.constant 0 : index
      %13 = vector.load %arg7[%c0_11, %c0_12] : memref<16x96xf32, #tpu.memory_space<vmem>>, vector<16x96xf32>
      tpu.vector_store %arg7[%c0_11, %c0_12], %12 {strides = array<i32>} : memref<16x96xf32, #tpu.memory_space<vmem>>, vector<16x96xf32>,
    } else {
    }
    %c0 = arith.constant 0 : index
    %c0_1 = arith.constant 0 : index
    %3 = vector.load %arg7[%c0, %c0_1] : memref<16x96xf32, #tpu.memory_space<vmem>>, vector<16x96xf32>
    %c0_2 = arith.constant 0 : index
    %c0_3 = arith.constant 0 : index
    %4 = vector.load %arg3[%c0_2, %c0_3] : memref<16x128xf32, #tpu.memory_space<vmem>>, vector<16x128xf32>
    %c0_4 = arith.constant 0 : index
    %c0_5 = arith.constant 0 : index
    %5 = vector.load %arg4[%c0_4, %c0_5] : memref<128x96xf32, #tpu.memory_space<vmem>>, vector<128x96xf32>
    %cst = arith.constant dense<0.000000e+00> : vector<16x96xf32>
    %6 = tpu.matmul %4, %5, %cst {dimension_numbers = #tpu.dot_dimension_numbers<[1], [0], [0], [1], [0, 0, 1, 1], [], []>} : vector<16x128xf32>, vector<128x96xf32>, vector<16x96xf32> -> vector<16x96xf32>
    %7 = arith.addf %3, %6 : vector<16x96xf32>
    %c0_6 = arith.constant 0 : index
    %c0_7 = arith.constant 0 : index
    %8 = vector.load %arg7[%c0_6, %c0_7] : memref<16x96xf32, #tpu.memory_space<vmem>>, vector<16x96xf32>
    tpu.vector_store %arg7[%c0_6, %c0_7], %7 {strides = array<i32>} : memref<16x96xf32, #tpu.memory_space<vmem>>, vector<16x96xf32>,
    %c0_i32_8 = arith.constant 0 : i32
    %9 = arith.cmpi eq, %arg2, %c0_i32_8 : i32
    %10 = arith.extui %9 : i1 to i32
    %c0_i32_9 = arith.constant 0 : i32
    %11 = arith.cmpi ne, %10, %c0_i32_9 : i32
    scf.if %11 {
      %c0_10 = arith.constant 0 : index
      %c0_11 = arith.constant 0 : index
      %12 = vector.load %arg7[%c0_10, %c0_11] : memref<16x96xf32, #tpu.memory_space<vmem>>, vector<16x96xf32>
      %c0_12 = arith.constant 0 : index
      %c0_13 = arith.constant 0 : index
      %13 = vector.load %arg5[%c0_12, %c0_13] : memref<1x96xf32, #tpu.memory_space<vmem>>, vector<1x96xf32>
      %14 = vector.broadcast %13 : vector<1x96xf32> to vector<16x96xf32>
      %15 = arith.addf %12, %14 : vector<16x96xf32>
      %c0_14 = arith.constant 0 : index
      %c0_15 = arith.constant 0 : index
      %16 = vector.load %arg6[%c0_14, %c0_15] : memref<16x96xf32, #tpu.memory_space<vmem>>, vector<16x96xf32>
      tpu.vector_store %arg6[%c0_14, %c0_15], %15 {strides = array<i32>} : memref<16x96xf32, #tpu.memory_space<vmem>>, vector<16x96xf32>,
    } else {
    }
    return
  }
  func.func @transform_0(%arg0: i32, %arg1: i32, %arg2: i32) -> (i32, i32) {
    %c0_i32 = arith.constant 0 : i32
    return %arg0, %arg2 : i32, i32
  }
  func.func @transform_1(%arg0: i32, %arg1: i32, %arg2: i32) -> (i32, i32) {
    %c0_i32 = arith.constant 0 : i32
    return %arg2, %arg1 : i32, i32
  }
  func.func @transform_2(%arg0: i32, %arg1: i32, %arg2: i32) -> (i32, i32) {
    %c0_i32 = arith.constant 0 : i32
    %c0_i32_0 = arith.constant 0 : i32
    return %c0_i32, %arg1 : i32, i32
  }
  func.func @transform_3(%arg0: i32, %arg1: i32, %arg2: i32) -> (i32, i32) {
    %c0_i32 = arith.constant 0 : i32
    return %arg0, %arg1 : i32, i32
  }
}

</mosaic_0001>

<llo_original>
// kernel: tpu_custom_call.1
$region0: #{tpu_custom_call.1}
  #allocation0 [shape = 'u32[]', space=smem, size = 0x4, offset = 0x4, fixed_abs, tag = 'smem constant byte address 0x4 - core index']
  #allocation1 [shape = 'u32[144,128]{1,0:T(1,128)}', space=vmem, size = 0x12000, scoped, tag = 'internal scratch']
  #allocation2 [shape = 'f32[16,96]{1,0:T(8,128)}', space=vmem, size = 0x2000, scoped, tag = 'scratch operand']
  %s0 = inlined_call_operand.vmem [shape: f32[16,128], index: 0, kind: input, shape index: {}]
  %s1 = inlined_call_operand.vmem [shape: f32[128,96], index: 1, kind: input, shape index: {}]
  %s2 = inlined_call_operand.vmem [shape: f32[1,96], index: 2, kind: input, shape index: {}]
  %s3 = inlined_call_operand.hbm [shape: f32[16,96], index: 3, kind: output, shape index: {}]
  %s4 = sld [smem:[#allocation0]]
  $region30: #{tpu_custom_call.1} parent=0
    _
  %s6 = ssub.s32 1, %s4
  %s7 = scalar_select 0, %s6, %s4
  $region1: #{tpu_custom_call.1} parent=0
    #allocation3 [shape = 'u8[8192]{0}', space=vmem, size = 0x2000, scoped, tag = 'output window, operand 0, single buffered']
    #allocation4 [shape = 's32[1]{0}', space=sflag, size = 0x4, scoped, tag = 'scoped memory for tpu_custom_call.1']
    %8 = vsyncpa [#allocation4], 0
    // Predicated region
    $region2: #{tpu_custom_call.1} parent=1 // pred_check
      _
    $region3: #{tpu_custom_call.1} parent=1 // pred_check_branch
      %10 = sbr.rel (0) target = $region5
    $region4: #{tpu_custom_call.1} parent=1 // pred_region
      _
    $region5: #{tpu_custom_call.1} parent=1 // pred_fallthru
      _
    // Predicated region
    $region6: #{tpu_custom_call.1} parent=1 // pred_check
      _
    $region7: #{tpu_custom_call.1} parent=1 // pred_check_branch
      %12 = sbr.rel (0) target = $region9
    $region8: #{tpu_custom_call.1} parent=1 // pred_region
      _
    $region9: #{tpu_custom_call.1} parent=1 // pred_fallthru
      _
    // Predicated region
    $region10: #{tpu_custom_call.1} parent=1 // pred_check
      _
    $region11: #{tpu_custom_call.1} parent=1 // pred_check_branch
      %14 = sbr.rel (0) target = $region13
    $region12: #{tpu_custom_call.1} parent=1 // pred_region
      _
    $region13: #{tpu_custom_call.1} parent=1 // pred_fallthru
      _
    %p15 = scmp.eq.s32.totalorder 0, 0
    // Predicated region
    $region14: #{tpu_custom_call.1} parent=1 // pred_check
      %p16 = pneg %p15
    $region15: #{tpu_custom_call.1} parent=1 // pred_check_branch
      %18 = sbr.rel (%p16) target = $region17
    $region16: #{tpu_custom_call.1} parent=1 // pred_region
      %vm19 = vcmask 785408
      %20 = vst.msk [vmem:[#allocation2] sm:$0xff] %vm19, 0.0
      %21 = vst.msk [vmem:[#allocation2 + $0x8] sm:$0xff] %vm19, 0.0
    $region17: #{tpu_custom_call.1} parent=1 // pred_fallthru
      _
    %v22 = vld [vmem:[#allocation2] sm:$0xff]
    %v23 = vld [vmem:[#allocation2 + $0x8] sm:$0xff]
    %v24 = vld [vmem:[%s0] sm:$0xff]
    %v25 = vld [vmem:[%s0 + $0x8] sm:$0xff]
    %v26 = vld [vmem:[%s1] sm:$0xff]
    %v27 = vld [vmem:[%s1 + $0x8] sm:$0xff]
    %v28 = vld [vmem:[%s1 + $0x10] sm:$0xff]
    %v29 = vld [vmem:[%s1 + $0x18] sm:$0xff]
    %v30 = vld [vmem:[%s1 + $0x20] sm:$0xff]
    %v31 = vld [vmem:[%s1 + $0x28] sm:$0xff]
    %v32 = vld [vmem:[%s1 + $0x30] sm:$0xff]
    %v33 = vld [vmem:[%s1 + $0x38] sm:$0xff]
    %v34 = vld [vmem:[%s1 + $0x40] sm:$0xff]
    %v35 = vld [vmem:[%s1 + $0x48] sm:$0xff]
    %v36 = vld [vmem:[%s1 + $0x50] sm:$0xff]
    %v37 = vld [vmem:[%s1 + $0x58] sm:$0xff]
    %v38 = vld [vmem:[%s1 + $0x60] sm:$0xff]
    %v39 = vld [vmem:[%s1 + $0x68] sm:$0xff]
    %v40 = vld [vmem:[%s1 + $0x70] sm:$0xff]
    %v41 = vld [vmem:[%s1 + $0x78] sm:$0xff]
    %42 = vmatprep.subr.mxu0 0.0
    %43 = vmatpush1.msra.mxu0 %v26
    %44 = vmatprep.subr.mxu0 0.0
    %45 = vmatpush1.msra.mxu0 %v27
    %46 = vmatprep.subr.mxu0 0.0
    %47 = vmatpush1.msra.mxu0 %v28
    %48 = vmatprep.subr.mxu0 0.0
    %49 = vmatpush1.msra.mxu0 %v29
    %50 = vmatprep.subr.mxu0 0.0
    %51 = vmatpush1.msra.mxu0 %v30
    %52 = vmatprep.subr.mxu0 0.0
    %53 = vmatpush1.msra.mxu0 %v31
    %54 = vmatprep.subr.mxu0 0.0
    %55 = vmatpush1.msra.mxu0 %v32
    %56 = vmatprep.subr.mxu0 0.0
    %57 = vmatpush1.msra.mxu0 %v33
    %58 = vmatprep.subr.mxu0 0.0
    %59 = vmatpush1.msra.mxu0 %v34
    %60 = vmatprep.subr.mxu0 0.0
    %61 = vmatpush1.msra.mxu0 %v35
    %62 = vmatprep.subr.mxu0 0.0
    %63 = vmatpush1.msra.mxu0 %v36
    %64 = vmatprep.subr.mxu0 0.0
    %65 = vmatpush1.msra.mxu0 %v37
    %66 = vmatprep.subr.mxu0 0.0
    %67 = vmatpush1.msra.mxu0 %v38
    %68 = vmatprep.subr.mxu0 0.0
    %69 = vmatpush1.msra.mxu0 %v39
    %70 = vmatprep.subr.mxu0 0.0
    %71 = vmatpush1.msra.mxu0 %v40
    %72 = vmatprep.subr.mxu0 0.0
    %73 = vmatpush1.msra.mxu0 %v41
    %74 = vmatprep.subr.mxu0 0.0
    %75 = vmatpush1.msra.mxu0 0.0
    %76 = vmatprep.subr.mxu0 0.0
    %77 = vmatpush1.msra.mxu0 0.0
    %78 = vmatprep.subr.mxu0 0.0
    %79 = vmatpush1.msra.mxu0 0.0
    %80 = vmatprep.subr.mxu0 0.0
    %81 = vmatpush1.msra.mxu0 0.0
    %82 = vmatprep.subr.mxu0 0.0
    %83 = vmatpush1.msra.mxu0 0.0
    %84 = vmatprep.subr.mxu0 0.0
    %85 = vmatpush1.msra.mxu0 0.0
    %86 = vmatprep.subr.mxu0 0.0
    %87 = vmatpush1.msra.mxu0 0.0
    %88 = vmatprep.subr.mxu0 0.0
    %89 = vmatpush1.msra.mxu0 0.0
    %90 = vmatprep.subr.mxu0 0.0
    %91 = vmatpush1.msra.mxu0 0.0
    %92 = vmatprep.subr.mxu0 0.0
    %93 = vmatpush1.msra.mxu0 0.0
    %94 = vmatprep.subr.mxu0 0.0
    %95 = vmatpush1.msra.mxu0 0.0
    %96 = vmatprep.subr.mxu0 0.0
    %97 = vmatpush1.msra.mxu0 0.0
    %98 = vmatprep.subr.mxu0 0.0
    %99 = vmatpush1.msra.mxu0 0.0
    %100 = vmatprep.subr.mxu0 0.0
    %101 = vmatpush1.msra.mxu0 0.0
    %102 = vmatprep.subr.mxu0 0.0
    %103 = vmatpush1.msra.mxu0 0.0
    %104 = vmatprep.subr.mxu0 0.0
    %105 = vmatpush1.msra.mxu0 0.0
    %106 = vmatprep.mubr.f32.mxu0 0.0
    %107 = vmatmul.mubr.f32.gmra.mrb[0].mxu0 %v24
    %v108 = vpop.f32.mrb[0].mxu0
    %v109 = vadd.f32 0.0, %v108
    %v110 = vpop.f32.mrb[0].mxu0
    %111 = vmatprep.mubr.f32.mxu0 0.0
    %112 = vmatmul.mubr.f32.gmra.mrb[0].mxu0 %v25
    %v113 = vpop.f32.mrb[0].mxu0
    %v114 = vadd.f32 0.0, %v113
    %v115 = vpop.f32.mrb[0].mxu0
    %116 = vdwg.mxu0
    %v117 = vadd.f32 %v22, %v109
    %v118 = vadd.f32 %v23, %v114
    %vm119 = vcmask 785408
    %120 = vst.msk [vmem:[#allocation2] sm:$0xff] %vm119, %v117
    %121 = vst.msk [vmem:[#allocation2 + $0x8] sm:$0xff] %vm119, %v118
    // Predicated region
    $region18: #{tpu_custom_call.1} parent=1 // pred_check
      %p122 = pneg %p15
    $region19: #{tpu_custom_call.1} parent=1 // pred_check_branch
      %124 = sbr.rel (%p122) target = $region21
    $region20: #{tpu_custom_call.1} parent=1 // pred_region
      %v125 = vld [vmem:[#allocation2] sm:$0xff]
      %v126 = vld [vmem:[#allocation2 + $0x8] sm:$0xff]
      %v127 = vld [vmem:[%s2] sm:$0x1]
      %v129 = vlaneseq
      %v130 = vshrl.u32 %v129, 7
      %v131 = vsub.s32 0, %v130
      %v132 = vrot.slane %v127, %v131
      %v134 = vadd.f32 %v125, %v132
      %v135 = vadd.f32 %v126, %v132
      %136 = vst.msk [vmem:[#allocation3] sm:$0xff] %vm119, %v134
      %137 = vst.msk [vmem:[#allocation3 + $0x8] sm:$0xff] %vm119, %v135
    $region21: #{tpu_custom_call.1} parent=1 // pred_fallthru
      _
    // Predicated region
    $region22: #{tpu_custom_call.1} parent=1 // pred_check
      _
    $region23: #{tpu_custom_call.1} parent=1 // pred_check_branch
      %139 = sbr.rel (0) target = $region25
    $region24: #{tpu_custom_call.1} parent=1 // pred_region
      %s141 = ssub.s32 256, 256
      %142 = vsyncadd [#allocation4], %s141
      %s143 = sshll.u32 [#allocation3], 4
      %s144 = int_to_ptr.vmem [resolvable:$true] %s143
      %149 = dma.vmem_to_hbm [thread:$0]  %s144, 256, %s3, [#allocation4], 128, 128, 8
    $region25: #{tpu_custom_call.1} parent=1 // pred_fallthru
      _
    // Predicated region
    $region26: #{tpu_custom_call.1} parent=1 // pred_check
      _
    $region27: #{tpu_custom_call.1} parent=1 // pred_check_branch
      %151 = sbr.rel (0) target = $region29
    $region28: #{tpu_custom_call.1} parent=1 // pred_region
      %152 = dma.done [#allocation4], 256
    $region29: #{tpu_custom_call.1} parent=1 // pred_fallthru
      _
    %153 = vsyncpa [#allocation4], 1

</llo_original>
